<compile_context>
chip_gen: v5e
topology: v5e:2x2
jax: 0.10.0
libtpu: 0.0.40
codegen_flags: <defaults>
</compile_context>

<pallas_src>
import functools

import jax
import jax.numpy as jnp
import numpy as np
from jax.experimental import pallas as pl
from jax.experimental.pallas import tpu as pltpu


def temporal_conv_glu_kernel(x_ref, wT_ref, b_ref, out_ref, *, n_vertex):
    # x_ref  : (B, Cin, L)      NCHW flattened, L = T*V (lane-dense, 128 wide)
    # wT_ref : (Kt, 2*C0, Cin)  per-tap transposed conv weight, Align folded in
    # b_ref  : (2*C0, 1)        conv bias
    # out_ref: (B, C0, L)       lane-dense output slab per batch
    B, Cin, L = x_ref.shape
    Kt, two_c0, _ = wT_ref.shape
    C0 = two_c0 // 2

    # Hoisted loop invariants (JAX does not CSE broadcast/iota across the static loops).
    w = [wT_ref[k] for k in range(Kt)]                        # each (2*C0, Cin)
    bias = jnp.broadcast_to(b_ref[...], (two_c0, L))          # (2*C0, L)
    lane = jax.lax.broadcasted_iota(jnp.int32, (Cin, L), 1)   # flat t*V + v index

    for bi in range(B):            # B is tiny & static: unrolled, one grid step
        xb = x_ref[bi]                                        # (Cin, L)
        acc = bias                                            # f32 acc, bias folded in
        for k in range(Kt):
            d = Kt - 1 - k         # causal delay (timesteps) of tap k
            if d == 0:
                xd = xb
            else:
                # Delay by d timesteps == shift d*V lanes toward higher indices,
                # then zero the causal prefix (t < d).
                xd = pltpu.roll(xb, shift=d * n_vertex, axis=1)
                xd = jnp.where(lane < d * n_vertex, 0.0, xd)
            acc = acc + jnp.dot(w[k], xd, preferred_element_type=jnp.float32)
        # GLU.  Align term (x_in) is already folded into the first C0 rows via the
        # identity added to the k = Kt-1 (zero-delay) weight tap.
        out_ref[bi] = acc[:C0] * jax.nn.sigmoid(acc[C0:])


def prepare_params(Wc, bc):
    """One-time parameter prep (keep OUT of the per-call forward path).

    Wc: (Kt, Cin, 2*C0) f32 -- PyTorch conv weight (2*C0, Cin, Kt, 1) reorganized
        to (k, ci, o).
    bc: (1, 2*C0) f32
    Returns (wT, b_col): (Kt, 2*C0, Cin) fused/transposed weight, (2*C0, 1) bias.
    """
    Kt, Cin, two_c0 = Wc.shape
    C0 = two_c0 // 2
    # Fold Align (channel zero-pad == matmul with [I | 0]) into the zero-delay tap.
    Wc_fused = Wc.at[Kt - 1, :, :C0].add(jnp.eye(Cin, C0, dtype=Wc.dtype))
    wT = jnp.transpose(Wc_fused, (0, 2, 1))                   # (Kt, 2*C0, Cin)
    b_col = bc.reshape(two_c0, 1)
    return wT, b_col


def temporal_conv_layer_forward(x_nchw, wT, b_col):
    """TemporalConvLayer forward (act_func='glu', c_in < c_out).

    x_nchw: (B, Cin, T, V) f32
    wT:     (Kt, 2*C0, Cin) f32   (from prepare_params)
    b_col:  (2*C0, 1) f32         (from prepare_params)
    returns (B, C0, T, V) f32
    """
    B, Cin, T, V = x_nchw.shape
    Kt, two_c0, _ = wT.shape
    C0 = two_c0 // 2
    L = T * V

    x_flat = x_nchw.reshape(B, Cin, L)        # contiguous NCHW: zero-copy reshape

    out_flat = pl.pallas_call(
        functools.partial(temporal_conv_glu_kernel, n_vertex=V),
        out_shape=jax.ShapeDtypeStruct((B, C0, L), jnp.float32),
        grid=(1,),                            # whole problem in one step: per-step
        in_specs=[                            # overhead dominates at this size
            pl.BlockSpec((B, Cin, L), lambda i: (0, 0, 0)),
            pl.BlockSpec((Kt, two_c0, Cin), lambda i: (0, 0, 0)),
            pl.BlockSpec((two_c0, 1), lambda i: (0, 0)),
        ],
        out_specs=pl.BlockSpec((B, C0, L), lambda i: (0, 0, 0)),
        # No dimension_semantics / vmem tuning: ~100 KiB resident, single step.
    )(x_flat, wT, b_col)

    return out_flat.reshape(B, C0, T, V)      # zero-copy reshape back to NCHW


def temporal_conv_layer_reference(x_nchw, Wc, bc):
    """Pure-JAX reference mirroring the PyTorch module (glu, c_in < c_out)."""
    B, Cin, T, V = x_nchw.shape
    Kt, _, two_c0 = Wc.shape
    C0 = two_c0 // 2

    x = jnp.transpose(x_nchw, (0, 2, 3, 1))                          # (B,T,V,Cin)
    xpad = jnp.pad(x, ((0, 0), (Kt - 1, 0), (0, 0), (0, 0)))
    conv = sum(jnp.einsum("btvi,io->btvo", xpad[:, k:k + T], Wc[k])
               for k in range(Kt)) + bc[0]
    x_in = jnp.concatenate(
        [x, jnp.zeros((B, T, V, C0 - Cin), x.dtype)], axis=-1)       # Align pad
    x_p, x_q = conv[..., :C0], conv[..., C0:]
    h = (x_p + x_in) * jax.nn.sigmoid(x_q)
    return jnp.transpose(h, (0, 3, 1, 2))                            # NCHW


if __name__ == "__main__":
    # TemporalConvLayer(Kt=3, c_in=4, c_out=32, n_vertex=16, act_func='glu')
    # applied to x of shape (batch=2, c_in=4, T=8, n_vertex=16).
    B, Cin, T, V = 2, 4, 8, 16
    Kt, C0 = 3, 32

    key = jax.random.PRNGKey(0)
    k_w, k_b, k_x = jax.random.split(key, 3)

    # CausalConv2d weight, reorganized from OIHW (2*C0, Cin, Kt, 1) to (Kt, Cin, 2*C0).
    Wc = 0.1 * jax.random.normal(k_w, (Kt, Cin, 2 * C0), jnp.float32)
    bc = 0.1 * jax.random.normal(k_b, (1, 2 * C0), jnp.float32)
    x = jax.random.normal(k_x, (B, Cin, T, V), jnp.float32)

    # One-time parameter prep (Align fold + transpose), outside the forward path.
    wT, b_col = prepare_params(Wc, bc)

    fwd = jax.jit(temporal_conv_layer_forward)
    out = jax.block_until_ready(fwd(x, wT, b_col))
    assert out.shape == (B, C0, T, V), out.shape

    ref = temporal_conv_layer_reference(x, Wc, bc)
    np.testing.assert_allclose(np.asarray(out), np.asarray(ref),
                               rtol=1e-4, atol=1e-4)

    print("KERNEL_OK")
</pallas_src>

<mosaic_0001>
module attributes {stable_mosaic.version = 11 : i64} {
  func.func @temporal_conv_glu_kernel(%arg0: i32, %arg1: memref<2x4x128xf32, #tpu.memory_space<vmem>>, %arg2: memref<3x64x4xf32, #tpu.memory_space<vmem>>, %arg3: memref<64x1xf32, #tpu.memory_space<vmem>>, %arg4: memref<2x32x128xf32, #tpu.memory_space<vmem>>) attributes {dimension_semantics = [#tpu.dimension_semantics<arbitrary>], iteration_bounds = array<i64: 1>, scalar_prefetch = 0 : i64, scratch_operands = 0 : i64, tpu.core_type = #tpu.core_type<tc>, window_params = [{pipeline_mode = #tpu.pipeline_mode<synchronous>, transform_indices = @transform_0, window_bounds = array<i64: 2, 4, 128>}, {pipeline_mode = #tpu.pipeline_mode<synchronous>, transform_indices = @transform_1, window_bounds = array<i64: 3, 64, 4>}, {pipeline_mode = #tpu.pipeline_mode<synchronous>, transform_indices = @transform_2, window_bounds = array<i64: 64, 1>}, {pipeline_mode = #tpu.pipeline_mode<synchronous>, transform_indices = @transform_3, window_bounds = array<i64: 2, 32, 128>}]} {
    %c0 = arith.constant 0 : index
    %c0_0 = arith.constant 0 : index
    %c0_1 = arith.constant 0 : index
    %0 = vector.load %arg2[%c0, %c0_0, %c0_1] : memref<3x64x4xf32, #tpu.memory_space<vmem>>, vector<1x64x4xf32>
    %1 = vector.shape_cast %0 : vector<1x64x4xf32> to vector<64x4xf32>
    %c1 = arith.constant 1 : index
    %c0_2 = arith.constant 0 : index
    %c0_3 = arith.constant 0 : index
    %2 = vector.load %arg2[%c1, %c0_2, %c0_3] : memref<3x64x4xf32, #tpu.memory_space<vmem>>, vector<1x64x4xf32>
    %3 = vector.shape_cast %2 : vector<1x64x4xf32> to vector<64x4xf32>
    %c2 = arith.constant 2 : index
    %c0_4 = arith.constant 0 : index
    %c0_5 = arith.constant 0 : index
    %4 = vector.load %arg2[%c2, %c0_4, %c0_5] : memref<3x64x4xf32, #tpu.memory_space<vmem>>, vector<1x64x4xf32>
    %5 = vector.shape_cast %4 : vector<1x64x4xf32> to vector<64x4xf32>
    %c0_6 = arith.constant 0 : index
    %c0_7 = arith.constant 0 : index
    %6 = vector.load %arg3[%c0_6, %c0_7] : memref<64x1xf32, #tpu.memory_space<vmem>>, vector<64x1xf32>
    %7 = vector.shape_cast %6 : vector<64x1xf32> to vector<64x1xf32>
    %8 = vector.broadcast %7 : vector<64x1xf32> to vector<64x128xf32>
    %9 = tpu.iota {dimensions = array<i32: 1>} : vector<4x128xi32>
    %c0_8 = arith.constant 0 : index
    %c0_9 = arith.constant 0 : index
    %c0_10 = arith.constant 0 : index
    %10 = vector.load %arg1[%c0_8, %c0_9, %c0_10] : memref<2x4x128xf32, #tpu.memory_space<vmem>>, vector<1x4x128xf32>
    %11 = vector.shape_cast %10 : vector<1x4x128xf32> to vector<4x128xf32>
    %c32_i32 = arith.constant 32 : i32
    %12 = tpu.dynamic_rotate %11 by %c32_i32 dim 1 : vector<4x128xf32>, i32 -> vector<4x128xf32>
    %c32_i32_11 = arith.constant 32 : i32
    %13 = vector.broadcast %c32_i32_11 : i32 to vector<4x128xi32>
    %14 = arith.cmpi slt, %9, %13 : vector<4x128xi32>
    %cst = arith.constant 0.000000e+00 : f32
    %15 = vector.broadcast %cst : f32 to vector<4x128xf32>
    %16 = arith.select %14, %15, %12 : vector<4x128xi1>, vector<4x128xf32>
    %cst_12 = arith.constant dense<0.000000e+00> : vector<64x128xf32>
    %17 = tpu.matmul %1, %16, %cst_12 {dimension_numbers = #tpu.dot_dimension_numbers<[1], [0], [0], [1], [0, 0, 1, 1], [], []>} : vector<64x4xf32>, vector<4x128xf32>, vector<64x128xf32> -> vector<64x128xf32>
    %18 = arith.addf %8, %17 : vector<64x128xf32>
    %c16_i32 = arith.constant 16 : i32
    %19 = tpu.dynamic_rotate %11 by %c16_i32 dim 1 : vector<4x128xf32>, i32 -> vector<4x128xf32>
    %c16_i32_13 = arith.constant 16 : i32
    %20 = vector.broadcast %c16_i32_13 : i32 to vector<4x128xi32>
    %21 = arith.cmpi slt, %9, %20 : vector<4x128xi32>
    %cst_14 = arith.constant 0.000000e+00 : f32
    %22 = vector.broadcast %cst_14 : f32 to vector<4x128xf32>
    %23 = arith.select %21, %22, %19 : vector<4x128xi1>, vector<4x128xf32>
    %cst_15 = arith.constant dense<0.000000e+00> : vector<64x128xf32>
    %24 = tpu.matmul %3, %23, %cst_15 {dimension_numbers = #tpu.dot_dimension_numbers<[1], [0], [0], [1], [0, 0, 1, 1], [], []>} : vector<64x4xf32>, vector<4x128xf32>, vector<64x128xf32> -> vector<64x128xf32>
    %25 = arith.addf %18, %24 : vector<64x128xf32>
    %cst_16 = arith.constant dense<0.000000e+00> : vector<64x128xf32>
    %26 = tpu.matmul %5, %11, %cst_16 {dimension_numbers = #tpu.dot_dimension_numbers<[1], [0], [0], [1], [0, 0, 1, 1], [], []>} : vector<64x4xf32>, vector<4x128xf32>, vector<64x128xf32> -> vector<64x128xf32>
    %27 = arith.addf %25, %26 : vector<64x128xf32>
    %28 = vector.extract_strided_slice %27 {offsets = [0, 0], sizes = [32, 128], strides = [1, 1]} : vector<64x128xf32> to vector<32x128xf32>
    %29 = vector.extract_strided_slice %27 {offsets = [32, 0], sizes = [32, 128], strides = [1, 1]} : vector<64x128xf32> to vector<32x128xf32>
    %30 = arith.negf %29 : vector<32x128xf32>
    %31 = math.exp %30 : vector<32x128xf32>
    %cst_17 = arith.constant 1.000000e+00 : f32
    %32 = vector.broadcast %cst_17 : f32 to vector<32x128xf32>
    %33 = arith.addf %32, %31 : vector<32x128xf32>
    %34 = arith.divf %32, %33 : vector<32x128xf32>
    %35 = arith.mulf %28, %34 : vector<32x128xf32>
    %c0_18 = arith.constant 0 : index
    %c0_19 = arith.constant 0 : index
    %c0_20 = arith.constant 0 : index
    %36 = vector.load %arg4[%c0_18, %c0_19, %c0_20] : memref<2x32x128xf32, #tpu.memory_space<vmem>>, vector<1x32x128xf32>
    %37 = vector.shape_cast %36 : vector<1x32x128xf32> to vector<32x128xf32>
    %38 = vector.shape_cast %35 : vector<32x128xf32> to vector<1x32x128xf32>
    tpu.vector_store %arg4[%c0_18, %c0_19, %c0_20], %38 {strides = array<i32>} : memref<2x32x128xf32, #tpu.memory_space<vmem>>, vector<1x32x128xf32>,
    %c1_21 = arith.constant 1 : index
    %c0_22 = arith.constant 0 : index
    %c0_23 = arith.constant 0 : index
    %39 = vector.load %arg1[%c1_21, %c0_22, %c0_23] : memref<2x4x128xf32, #tpu.memory_space<vmem>>, vector<1x4x128xf32>
    %40 = vector.shape_cast %39 : vector<1x4x128xf32> to vector<4x128xf32>
    %c32_i32_24 = arith.constant 32 : i32
    %41 = tpu.dynamic_rotate %40 by %c32_i32_24 dim 1 : vector<4x128xf32>, i32 -> vector<4x128xf32>
    %c32_i32_25 = arith.constant 32 : i32
    %42 = vector.broadcast %c32_i32_25 : i32 to vector<4x128xi32>
    %43 = arith.cmpi slt, %9, %42 : vector<4x128xi32>
    %cst_26 = arith.constant 0.000000e+00 : f32
    %44 = vector.broadcast %cst_26 : f32 to vector<4x128xf32>
    %45 = arith.select %43, %44, %41 : vector<4x128xi1>, vector<4x128xf32>
    %cst_27 = arith.constant dense<0.000000e+00> : vector<64x128xf32>
    %46 = tpu.matmul %1, %45, %cst_27 {dimension_numbers = #tpu.dot_dimension_numbers<[1], [0], [0], [1], [0, 0, 1, 1], [], []>} : vector<64x4xf32>, vector<4x128xf32>, vector<64x128xf32> -> vector<64x128xf32>
    %47 = arith.addf %8, %46 : vector<64x128xf32>
    %c16_i32_28 = arith.constant 16 : i32
    %48 = tpu.dynamic_rotate %40 by %c16_i32_28 dim 1 : vector<4x128xf32>, i32 -> vector<4x128xf32>
    %c16_i32_29 = arith.constant 16 : i32
    %49 = vector.broadcast %c16_i32_29 : i32 to vector<4x128xi32>
    %50 = arith.cmpi slt, %9, %49 : vector<4x128xi32>
    %cst_30 = arith.constant 0.000000e+00 : f32
    %51 = vector.broadcast %cst_30 : f32 to vector<4x128xf32>
    %52 = arith.select %50, %51, %48 : vector<4x128xi1>, vector<4x128xf32>
    %cst_31 = arith.constant dense<0.000000e+00> : vector<64x128xf32>
    %53 = tpu.matmul %3, %52, %cst_31 {dimension_numbers = #tpu.dot_dimension_numbers<[1], [0], [0], [1], [0, 0, 1, 1], [], []>} : vector<64x4xf32>, vector<4x128xf32>, vector<64x128xf32> -> vector<64x128xf32>
    %54 = arith.addf %47, %53 : vector<64x128xf32>
    %cst_32 = arith.constant dense<0.000000e+00> : vector<64x128xf32>
    %55 = tpu.matmul %5, %40, %cst_32 {dimension_numbers = #tpu.dot_dimension_numbers<[1], [0], [0], [1], [0, 0, 1, 1], [], []>} : vector<64x4xf32>, vector<4x128xf32>, vector<64x128xf32> -> vector<64x128xf32>
    %56 = arith.addf %54, %55 : vector<64x128xf32>
    %57 = vector.extract_strided_slice %56 {offsets = [0, 0], sizes = [32, 128], strides = [1, 1]} : vector<64x128xf32> to vector<32x128xf32>
    %58 = vector.extract_strided_slice %56 {offsets = [32, 0], sizes = [32, 128], strides = [1, 1]} : vector<64x128xf32> to vector<32x128xf32>
    %59 = arith.negf %58 : vector<32x128xf32>
    %60 = math.exp %59 : vector<32x128xf32>
    %cst_33 = arith.constant 1.000000e+00 : f32
    %61 = vector.broadcast %cst_33 : f32 to vector<32x128xf32>
    %62 = arith.addf %61, %60 : vector<32x128xf32>
    %63 = arith.divf %61, %62 : vector<32x128xf32>
    %64 = arith.mulf %57, %63 : vector<32x128xf32>
    %c1_34 = arith.constant 1 : index
    %c0_35 = arith.constant 0 : index
    %c0_36 = arith.constant 0 : index
    %65 = vector.load %arg4[%c1_34, %c0_35, %c0_36] : memref<2x32x128xf32, #tpu.memory_space<vmem>>, vector<1x32x128xf32>
    %66 = vector.shape_cast %65 : vector<1x32x128xf32> to vector<32x128xf32>
    %67 = vector.shape_cast %64 : vector<32x128xf32> to vector<1x32x128xf32>
    tpu.vector_store %arg4[%c1_34, %c0_35, %c0_36], %67 {strides = array<i32>} : memref<2x32x128xf32, #tpu.memory_space<vmem>>, vector<1x32x128xf32>,
    return
  }
  func.func @transform_0(%arg0: i32) -> (i32, i32, i32) {
    %c0_i32 = arith.constant 0 : i32
    %c0_i32_0 = arith.constant 0 : i32
    %c0_i32_1 = arith.constant 0 : i32
    %c0_i32_2 = arith.constant 0 : i32
    return %c0_i32, %c0_i32_0, %c0_i32_1 : i32, i32, i32
  }
  func.func @transform_1(%arg0: i32) -> (i32, i32, i32) {
    %c0_i32 = arith.constant 0 : i32
    %c0_i32_0 = arith.constant 0 : i32
    %c0_i32_1 = arith.constant 0 : i32
    %c0_i32_2 = arith.constant 0 : i32
    return %c0_i32, %c0_i32_0, %c0_i32_1 : i32, i32, i32
  }
  func.func @transform_2(%arg0: i32) -> (i32, i32) {
    %c0_i32 = arith.constant 0 : i32
    %c0_i32_0 = arith.constant 0 : i32
    %c0_i32_1 = arith.constant 0 : i32
    return %c0_i32, %c0_i32_0 : i32, i32
  }
  func.func @transform_3(%arg0: i32) -> (i32, i32, i32) {
    %c0_i32 = arith.constant 0 : i32
    %c0_i32_0 = arith.constant 0 : i32
    %c0_i32_1 = arith.constant 0 : i32
    %c0_i32_2 = arith.constant 0 : i32
    return %c0_i32, %c0_i32_0, %c0_i32_1 : i32, i32, i32
  }
}

</mosaic_0001>

<llo_original>
// kernel: temporal_conv_layer_forward.1
$region0: #{temporal_conv_layer_forward.1}
  #allocation0 [shape = 'u32[]', space=smem, size = 0x4, offset = 0x4, fixed_abs, tag = 'smem constant byte address 0x4 - core index']
  #allocation1 [shape = 'u32[72,128]{1,0:T(1,128)}', space=vmem, size = 0x9000, scoped, tag = 'internal scratch']
  %s0 = inlined_call_operand.vmem [shape: f32[2,4,128], index: 0, kind: input, shape index: {}]
  %s1 = inlined_call_operand.vmem [shape: f32[3,64,4], index: 1, kind: input, shape index: {}]
  %s2 = inlined_call_operand.vmem [shape: f32[64,1], index: 2, kind: input, shape index: {}]
  %s3 = inlined_call_operand.vmem [shape: f32[2,32,128], index: 3, kind: output, shape index: {}]
  %s4 = sld [smem:[#allocation0]]
  $region22: #{temporal_conv_layer_forward.1} parent=0
    _
  %s6 = ssub.s32 1, %s4
  %s7 = scalar_select 0, %s6, %s4
  // Predicated region
  $region2: #{temporal_conv_layer_forward.1} parent=0 // pred_check
    _
  $region3: #{temporal_conv_layer_forward.1} parent=0 // pred_check_branch
    %9 = sbr.rel (0) target = $region5
  $region4: #{temporal_conv_layer_forward.1} parent=0 // pred_region
    _
  $region5: #{temporal_conv_layer_forward.1} parent=0 // pred_fallthru
    _
  // Predicated region
  $region6: #{temporal_conv_layer_forward.1} parent=0 // pred_check
    _
  $region7: #{temporal_conv_layer_forward.1} parent=0 // pred_check_branch
    %11 = sbr.rel (0) target = $region9
  $region8: #{temporal_conv_layer_forward.1} parent=0 // pred_region
    _
  $region9: #{temporal_conv_layer_forward.1} parent=0 // pred_fallthru
    _
  // Predicated region
  $region10: #{temporal_conv_layer_forward.1} parent=0 // pred_check
    _
  $region11: #{temporal_conv_layer_forward.1} parent=0 // pred_check_branch
    %13 = sbr.rel (0) target = $region13
  $region12: #{temporal_conv_layer_forward.1} parent=0 // pred_region
    _
  $region13: #{temporal_conv_layer_forward.1} parent=0 // pred_fallthru
    _
  %v14 = vld [vmem:[%s1] sm:$0xff]
  %v15 = vld [vmem:[%s1 + $0x8] sm:$0xff]
  %v16 = vld [vmem:[%s1 + $0x10] sm:$0xff]
  %v17 = vld [vmem:[%s1 + $0x18] sm:$0xff]
  %v18 = vld [vmem:[%s1 + $0x20] sm:$0xff]
  %v19 = vld [vmem:[%s1 + $0x28] sm:$0xff]
  %v20 = vld [vmem:[%s1 + $0x30] sm:$0xff]
  %v21 = vld [vmem:[%s1 + $0x38] sm:$0xff]
  %s22 = scalar_lea.vmem %s1, 64
  %v23 = vld [vmem:[%s22] sm:$0xff]
  %v24 = vld [vmem:[%s22 + $0x8] sm:$0xff]
  %v25 = vld [vmem:[%s22 + $0x10] sm:$0xff]
  %v26 = vld [vmem:[%s22 + $0x18] sm:$0xff]
  %v27 = vld [vmem:[%s22 + $0x20] sm:$0xff]
  %v28 = vld [vmem:[%s22 + $0x28] sm:$0xff]
  %v29 = vld [vmem:[%s22 + $0x30] sm:$0xff]
  %v30 = vld [vmem:[%s22 + $0x38] sm:$0xff]
  %s31 = scalar_lea.vmem %s1, 128
  %v32 = vld [vmem:[%s31] sm:$0xff]
  %v33 = vld [vmem:[%s31 + $0x8] sm:$0xff]
  %v34 = vld [vmem:[%s31 + $0x10] sm:$0xff]
  %v35 = vld [vmem:[%s31 + $0x18] sm:$0xff]
  %v36 = vld [vmem:[%s31 + $0x20] sm:$0xff]
  %v37 = vld [vmem:[%s31 + $0x28] sm:$0xff]
  %v38 = vld [vmem:[%s31 + $0x30] sm:$0xff]
  %v39 = vld [vmem:[%s31 + $0x38] sm:$0xff]
  %v40 = vld [vmem:[%s2] sm:$0xff]
  %v41 = vld [vmem:[%s2 + $0x8] sm:$0xff]
  %v42 = vld [vmem:[%s2 + $0x10] sm:$0xff]
  %v43 = vld [vmem:[%s2 + $0x18] sm:$0xff]
  %v44 = vld [vmem:[%s2 + $0x20] sm:$0xff]
  %v45 = vld [vmem:[%s2 + $0x28] sm:$0xff]
  %v46 = vld [vmem:[%s2 + $0x30] sm:$0xff]
  %v47 = vld [vmem:[%s2 + $0x38] sm:$0xff]
  %49 = vset.pattern.permute.xlu0 0
  %50 = vperm.xlu0 %49, %v40
  %v51 = vpop.permute.xlu0 %50
  %54 = vset.pattern.permute.xlu0 0
  %55 = vperm.xlu0 %54, %v41
  %v56 = vpop.permute.xlu0 %55
  %59 = vset.pattern.permute.xlu0 0
  %60 = vperm.xlu0 %59, %v42
  %v61 = vpop.permute.xlu0 %60
  %64 = vset.pattern.permute.xlu0 0
  %65 = vperm.xlu0 %64, %v43
  %v66 = vpop.permute.xlu0 %65
  %69 = vset.pattern.permute.xlu0 0
  %70 = vperm.xlu0 %69, %v44
  %v71 = vpop.permute.xlu0 %70
  %74 = vset.pattern.permute.xlu0 0
  %75 = vperm.xlu0 %74, %v45
  %v76 = vpop.permute.xlu0 %75
  %79 = vset.pattern.permute.xlu0 0
  %80 = vperm.xlu0 %79, %v46
  %v81 = vpop.permute.xlu0 %80
  %84 = vset.pattern.permute.xlu0 0
  %85 = vperm.xlu0 %84, %v47
  %v86 = vpop.permute.xlu0 %85
  %v88 = vlaneseq
  %v89 = vand.u32 %v88, 127
  %v90 = vld [vmem:[%s0] sm:$0xf]
  %91 = vrot.lane.b32.xlu0 %v90, 32
  %v92 = vpop.permute.xlu0 %91
  %vm93 = vcmp.lt.s32.totalorder %v89, 32
  %v94 = vsel %vm93, 0.0, %v92
  %vm95 = vcmask 31744
  %v97 = vsel %vm95, %v14, 0
  %v100 = vsel %vm95, %v15, 0
  %v103 = vsel %vm95, %v16, 0
  %v106 = vsel %vm95, %v17, 0
  %v109 = vsel %vm95, %v18, 0
  %v112 = vsel %vm95, %v19, 0
  %v115 = vsel %vm95, %v20, 0
  %v118 = vsel %vm95, %v21, 0
  %vm120 = vcmask 1043456
  %v122 = vsel %vm120, %v94, 0
  %124 = vmatpush.msra.mxu0 0.0
  %125 = vmatpush.msra.mxu0 0.0
  %126 = vmatpush.msra.mxu0 0.0
  %127 = vmatpush.msra.mxu0 0.0
  %128 = vmatpush.msra.mxu0 0.0
  %129 = vmatpush.msra.mxu0 0.0
  %130 = vmatpush.msra.mxu0 0.0
  %131 = vmatpush.msra.mxu0 0.0
  %132 = vmatpush.msra.mxu0 0.0
  %133 = vmatpush.msra.mxu0 0.0
  %134 = vmatpush.msra.mxu0 0.0
  %135 = vmatpush.msra.mxu0 0.0
  %136 = vmatpush.msra.mxu0 0.0
  %137 = vmatpush.msra.mxu0 0.0
  %138 = vmatpush.msra.mxu0 0.0
  %139 = vmatpush.msra.mxu0 %v122
  %140 = vmatmul.f32.gmra.mxu0 %v97
  %v141 = vpop.f32.mrf.mxu0
  %v142 = vadd.f32 0.0, %v141
  %143 = vmatmul.f32.gmra.mxu0 %v100
  %v144 = vpop.f32.mrf.mxu0
  %v145 = vadd.f32 0.0, %v144
  %146 = vmatmul.f32.gmra.mxu0 %v103
  %v147 = vpop.f32.mrf.mxu0
  %v148 = vadd.f32 0.0, %v147
  %149 = vmatmul.f32.gmra.mxu0 %v106
  %v150 = vpop.f32.mrf.mxu0
  %v151 = vadd.f32 0.0, %v150
  %152 = vmatmul.f32.gmra.mxu0 %v109
  %v153 = vpop.f32.mrf.mxu0
  %v154 = vadd.f32 0.0, %v153
  %155 = vmatmul.f32.gmra.mxu0 %v112
  %v156 = vpop.f32.mrf.mxu0
  %v157 = vadd.f32 0.0, %v156
  %158 = vmatmul.f32.gmra.mxu0 %v115
  %v159 = vpop.f32.mrf.mxu0
  %v160 = vadd.f32 0.0, %v159
  %161 = vmatmul.f32.gmra.mxu0 %v118
  %v162 = vpop.f32.mrf.mxu0
  %v163 = vadd.f32 0.0, %v162
  %164 = vdwg.mxu0
  %v165 = vadd.f32 %v51, %v142
  %v166 = vadd.f32 %v56, %v145
  %v167 = vadd.f32 %v61, %v148
  %v168 = vadd.f32 %v66, %v151
  %v169 = vadd.f32 %v71, %v154
  %v170 = vadd.f32 %v76, %v157
  %v171 = vadd.f32 %v81, %v160
  %v172 = vadd.f32 %v86, %v163
  %173 = vrot.lane.b32.xlu0 %v90, 16
  %v174 = vpop.permute.xlu0 %173
  %vm175 = vcmp.lt.s32.totalorder %v89, 16
  %v176 = vsel %vm175, 0.0, %v174
  %v178 = vsel %vm95, %v23, 0
  %v181 = vsel %vm95, %v24, 0
  %v184 = vsel %vm95, %v25, 0
  %v187 = vsel %vm95, %v26, 0
  %v190 = vsel %vm95, %v27, 0
  %v193 = vsel %vm95, %v28, 0
  %v196 = vsel %vm95, %v29, 0
  %v199 = vsel %vm95, %v30, 0
  %v202 = vsel %vm120, %v176, 0
  %204 = vmatpush.msra.mxu0 0.0
  %205 = vmatpush.msra.mxu0 0.0
  %206 = vmatpush.msra.mxu0 0.0
  %207 = vmatpush.msra.mxu0 0.0
  %208 = vmatpush.msra.mxu0 0.0
  %209 = vmatpush.msra.mxu0 0.0
  %210 = vmatpush.msra.mxu0 0.0
  %211 = vmatpush.msra.mxu0 0.0
  %212 = vmatpush.msra.mxu0 0.0
  %213 = vmatpush.msra.mxu0 0.0
  %214 = vmatpush.msra.mxu0 0.0
  %215 = vmatpush.msra.mxu0 0.0
  %216 = vmatpush.msra.mxu0 0.0
  %217 = vmatpush.msra.mxu0 0.0
  %218 = vmatpush.msra.mxu0 0.0
  %219 = vmatpush.msra.mxu0 %v202
  %220 = vmatmul.f32.gmra.mxu0 %v178
  %v221 = vpop.f32.mrf.mxu0
  %v222 = vadd.f32 0.0, %v221
  %223 = vmatmul.f32.gmra.mxu0 %v181
  %v224 = vpop.f32.mrf.mxu0
  %v225 = vadd.f32 0.0, %v224
  %226 = vmatmul.f32.gmra.mxu0 %v184
  %v227 = vpop.f32.mrf.mxu0
  %v228 = vadd.f32 0.0, %v227
  %229 = vmatmul.f32.gmra.mxu0 %v187
  %v230 = vpop.f32.mrf.mxu0
  %v231 = vadd.f32 0.0, %v230
  %232 = vmatmul.f32.gmra.mxu0 %v190
  %v233 = vpop.f32.mrf.mxu0
  %v234 = vadd.f32 0.0, %v233
  %235 = vmatmul.f32.gmra.mxu0 %v193
  %v236 = vpop.f32.mrf.mxu0
  %v237 = vadd.f32 0.0, %v236
  %238 = vmatmul.f32.gmra.mxu0 %v196
  %v239 = vpop.f32.mrf.mxu0
  %v240 = vadd.f32 0.0, %v239
  %241 = vmatmul.f32.gmra.mxu0 %v199
  %v242 = vpop.f32.mrf.mxu0
  %v243 = vadd.f32 0.0, %v242
  %244 = vdwg.mxu0
  %v245 = vadd.f32 %v165, %v222
  %v246 = vadd.f32 %v166, %v225
  %v247 = vadd.f32 %v167, %v228
  %v248 = vadd.f32 %v168, %v231
  %v249 = vadd.f32 %v169, %v234
  %v250 = vadd.f32 %v170, %v237
  %v251 = vadd.f32 %v171, %v240
  %v252 = vadd.f32 %v172, %v243
  %v254 = vsel %vm95, %v32, 0
  %v257 = vsel %vm95, %v33, 0
  %v260 = vsel %vm95, %v34, 0
  %v263 = vsel %vm95, %v35, 0
  %v266 = vsel %vm95, %v36, 0
  %v269 = vsel %vm95, %v37, 0
  %v272 = vsel %vm95, %v38, 0
  %v275 = vsel %vm95, %v39, 0
  %v278 = vsel %vm120, %v90, 0
  %280 = vmatpush.msra.mxu0 0.0
  %281 = vmatpush.msra.mxu0 0.0
  %282 = vmatpush.msra.mxu0 0.0
  %283 = vmatpush.msra.mxu0 0.0
  %284 = vmatpush.msra.mxu0 0.0
  %285 = vmatpush.msra.mxu0 0.0
  %286 = vmatpush.msra.mxu0 0.0
  %287 = vmatpush.msra.mxu0 0.0
  %288 = vmatpush.msra.mxu0 0.0
  %289 = vmatpush.msra.mxu0 0.0
  %290 = vmatpush.msra.mxu0 0.0
  %291 = vmatpush.msra.mxu0 0.0
  %292 = vmatpush.msra.mxu0 0.0
  %293 = vmatpush.msra.mxu0 0.0
  %294 = vmatpush.msra.mxu0 0.0
  %295 = vmatpush.msra.mxu0 %v278
  %296 = vmatmul.f32.gmra.mxu0 %v254
  %v297 = vpop.f32.mrf.mxu0
  %v298 = vadd.f32 0.0, %v297
  %299 = vmatmul.f32.gmra.mxu0 %v257
  %v300 = vpop.f32.mrf.mxu0
  %v301 = vadd.f32 0.0, %v300
  %302 = vmatmul.f32.gmra.mxu0 %v260
  %v303 = vpop.f32.mrf.mxu0
  %v304 = vadd.f32 0.0, %v303
  %305 = vmatmul.f32.gmra.mxu0 %v263
  %v306 = vpop.f32.mrf.mxu0
  %v307 = vadd.f32 0.0, %v306
  %308 = vmatmul.f32.gmra.mxu0 %v266
  %v309 = vpop.f32.mrf.mxu0
  %v310 = vadd.f32 0.0, %v309
  %311 = vmatmul.f32.gmra.mxu0 %v269
  %v312 = vpop.f32.mrf.mxu0
  %v313 = vadd.f32 0.0, %v312
  %314 = vmatmul.f32.gmra.mxu0 %v272
  %v315 = vpop.f32.mrf.mxu0
  %v316 = vadd.f32 0.0, %v315
  %317 = vmatmul.f32.gmra.mxu0 %v275
  %v318 = vpop.f32.mrf.mxu0
  %v319 = vadd.f32 0.0, %v318
  %320 = vdwg.mxu0
  %v321 = vadd.f32 %v245, %v298
  %v322 = vadd.f32 %v246, %v301
  %v323 = vadd.f32 %v247, %v304
  %v324 = vadd.f32 %v248, %v307
  %v325 = vadd.f32 %v249, %v310
  %v326 = vadd.f32 %v250, %v313
  %v327 = vadd.f32 %v251, %v316
  %v328 = vadd.f32 %v252, %v319
  %v329 = vxor.u32 %v325, 2147483648
  %v330 = vxor.u32 %v326, 2147483648
  %v331 = vxor.u32 %v327, 2147483648
  %v332 = vxor.u32 %v328, 2147483648
  %v333 = vmul.f32 %v329, 1.442695
  %v334 = vpow.pop %v333
  %v335 = vmul.f32 %v330, 1.442695
  %v336 = vpow.pop %v335
  %v337 = vmul.f32 %v331, 1.442695
  %v338 = vpow.pop %v337
  %v339 = vmul.f32 %v332, 1.442695
  %v340 = vpow.pop %v339
  %v341 = vadd.f32 %v334, 1.0
  %v342 = vadd.f32 %v336, 1.0
  %v343 = vadd.f32 %v338, 1.0
  %v344 = vadd.f32 %v340, 1.0
  %v345 = vrcp.pop %v341
  %v346 = vmul.f32 %v341, %v345
  %v347 = vsub.f32 1.0, %v346
  %v348 = vmul.f32 %v345, %v347
  %v349 = vadd.f32 %v345, %v348
  %vm350 = vweird.f32 %v341
  %vm351 = vweird.f32 %v345
  %vm352 = vmor %vm350, %vm351
  %v353 = vsel %vm352, %v345, %v349
  %v354 = vand.u32 2147483647, %v341
  %vm355 = vcmp.eq.f32.partialorder %v354, 8.507059e+37
  %v356 = vand.u32 %v341, 2147483648
  %v357 = vor.u32 1.1754944e-38, %v356
  %v358 = vsel %vm355, %v357, %v353
  %v359 = vmul.f32 1.0, %v358
  %v360 = vrcp.pop %v342
  %v361 = vmul.f32 %v342, %v360
  %v362 = vsub.f32 1.0, %v361
  %v363 = vmul.f32 %v360, %v362
  %v364 = vadd.f32 %v360, %v363
  %vm365 = vweird.f32 %v342
  %vm366 = vweird.f32 %v360
  %vm367 = vmor %vm365, %vm366
  %v368 = vsel %vm367, %v360, %v364
  %v369 = vand.u32 2147483647, %v342
  %vm370 = vcmp.eq.f32.partialorder %v369, 8.507059e+37
  %v371 = vand.u32 %v342, 2147483648
  %v372 = vor.u32 1.1754944e-38, %v371
  %v373 = vsel %vm370, %v372, %v368
  %v374 = vmul.f32 1.0, %v373
  %v375 = vrcp.pop %v343
  %v376 = vmul.f32 %v343, %v375
  %v377 = vsub.f32 1.0, %v376
  %v378 = vmul.f32 %v375, %v377
  %v379 = vadd.f32 %v375, %v378
  %vm380 = vweird.f32 %v343
  %vm381 = vweird.f32 %v375
  %vm382 = vmor %vm380, %vm381
  %v383 = vsel %vm382, %v375, %v379
  %v384 = vand.u32 2147483647, %v343
  %vm385 = vcmp.eq.f32.partialorder %v384, 8.507059e+37
  %v386 = vand.u32 %v343, 2147483648
  %v387 = vor.u32 1.1754944e-38, %v386
  %v388 = vsel %vm385, %v387, %v383
  %v389 = vmul.f32 1.0, %v388
  %v390 = vrcp.pop %v344
  %v391 = vmul.f32 %v344, %v390
  %v392 = vsub.f32 1.0, %v391
  %v393 = vmul.f32 %v390, %v392
  %v394 = vadd.f32 %v390, %v393
  %vm395 = vweird.f32 %v344
  %vm396 = vweird.f32 %v390
  %vm397 = vmor %vm395, %vm396
  %v398 = vsel %vm397, %v390, %v394
  %v399 = vand.u32 2147483647, %v344
  %vm400 = vcmp.eq.f32.partialorder %v399, 8.507059e+37
  %v401 = vand.u32 %v344, 2147483648
  %v402 = vor.u32 1.1754944e-38, %v401
  %v403 = vsel %vm400, %v402, %v398
  %v404 = vmul.f32 1.0, %v403
  %v405 = vmul.f32 %v321, %v359
  %v406 = vmul.f32 %v322, %v374
  %v407 = vmul.f32 %v323, %v389
  %v408 = vmul.f32 %v324, %v404
  %409 = vst [vmem:[%s3] sm:$0xff] %v405
  %410 = vst [vmem:[%s3 + $0x8] sm:$0xff] %v406
  %411 = vst [vmem:[%s3 + $0x10] sm:$0xff] %v407
  %412 = vst [vmem:[%s3 + $0x18] sm:$0xff] %v408
  %s413 = scalar_lea.vmem %s0, 4
  %v414 = vld [vmem:[%s413] sm:$0xf]
  %415 = vrot.lane.b32.xlu0 %v414, 32
  %v416 = vpop.permute.xlu0 %415
  %v417 = vsel %vm93, 0.0, %v416
  %v419 = vsel %vm120, %v417, 0
  %421 = vmatpush.msra.mxu0 0.0
  %422 = vmatpush.msra.mxu0 0.0
  %423 = vmatpush.msra.mxu0 0.0
  %424 = vmatpush.msra.mxu0 0.0
  %425 = vmatpush.msra.mxu0 0.0
  %426 = vmatpush.msra.mxu0 0.0
  %427 = vmatpush.msra.mxu0 0.0
  %428 = vmatpush.msra.mxu0 0.0
  %429 = vmatpush.msra.mxu0 0.0
  %430 = vmatpush.msra.mxu0 0.0
  %431 = vmatpush.msra.mxu0 0.0
  %432 = vmatpush.msra.mxu0 0.0
  %433 = vmatpush.msra.mxu0 0.0
  %434 = vmatpush.msra.mxu0 0.0
  %435 = vmatpush.msra.mxu0 0.0
  %436 = vmatpush.msra.mxu0 %v419
  %437 = vmatmul.f32.gmra.mxu0 %v97
  %v438 = vpop.f32.mrf.mxu0
  %v439 = vadd.f32 0.0, %v438
  %440 = vmatmul.f32.gmra.mxu0 %v100
  %v441 = vpop.f32.mrf.mxu0
  %v442 = vadd.f32 0.0, %v441
  %443 = vmatmul.f32.gmra.mxu0 %v103
  %v444 = vpop.f32.mrf.mxu0
  %v445 = vadd.f32 0.0, %v444
  %446 = vmatmul.f32.gmra.mxu0 %v106
  %v447 = vpop.f32.mrf.mxu0
  %v448 = vadd.f32 0.0, %v447
  %449 = vmatmul.f32.gmra.mxu0 %v109
  %v450 = vpop.f32.mrf.mxu0
  %v451 = vadd.f32 0.0, %v450
  %452 = vmatmul.f32.gmra.mxu0 %v112
  %v453 = vpop.f32.mrf.mxu0
  %v454 = vadd.f32 0.0, %v453
  %455 = vmatmul.f32.gmra.mxu0 %v115
  %v456 = vpop.f32.mrf.mxu0
  %v457 = vadd.f32 0.0, %v456
  %458 = vmatmul.f32.gmra.mxu0 %v118
  %v459 = vpop.f32.mrf.mxu0
  %v460 = vadd.f32 0.0, %v459
  %461 = vdwg.mxu0
  %v462 = vadd.f32 %v51, %v439
  %v463 = vadd.f32 %v56, %v442
  %v464 = vadd.f32 %v61, %v445
  %v465 = vadd.f32 %v66, %v448
  %v466 = vadd.f32 %v71, %v451
  %v467 = vadd.f32 %v76, %v454
  %v468 = vadd.f32 %v81, %v457
  %v469 = vadd.f32 %v86, %v460
  %470 = vrot.lane.b32.xlu0 %v414, 16
  %v471 = vpop.permute.xlu0 %470
  %v472 = vsel %vm175, 0.0, %v471
  %v474 = vsel %vm120, %v472, 0
  %476 = vmatpush.msra.mxu0 0.0
  %477 = vmatpush.msra.mxu0 0.0
  %478 = vmatpush.msra.mxu0 0.0
  %479 = vmatpush.msra.mxu0 0.0
  %480 = vmatpush.msra.mxu0 0.0
  %481 = vmatpush.msra.mxu0 0.0
  %482 = vmatpush.msra.mxu0 0.0
  %483 = vmatpush.msra.mxu0 0.0
  %484 = vmatpush.msra.mxu0 0.0
  %485 = vmatpush.msra.mxu0 0.0
  %486 = vmatpush.msra.mxu0 0.0
  %487 = vmatpush.msra.mxu0 0.0
  %488 = vmatpush.msra.mxu0 0.0
  %489 = vmatpush.msra.mxu0 0.0
  %490 = vmatpush.msra.mxu0 0.0
  %491 = vmatpush.msra.mxu0 %v474
  %492 = vmatmul.f32.gmra.mxu0 %v178
  %v493 = vpop.f32.mrf.mxu0
  %v494 = vadd.f32 0.0, %v493
  %495 = vmatmul.f32.gmra.mxu0 %v181
  %v496 = vpop.f32.mrf.mxu0
  %v497 = vadd.f32 0.0, %v496
  %498 = vmatmul.f32.gmra.mxu0 %v184
  %v499 = vpop.f32.mrf.mxu0
  %v500 = vadd.f32 0.0, %v499
  %501 = vmatmul.f32.gmra.mxu0 %v187
  %v502 = vpop.f32.mrf.mxu0
  %v503 = vadd.f32 0.0, %v502
  %504 = vmatmul.f32.gmra.mxu0 %v190
  %v505 = vpop.f32.mrf.mxu0
  %v506 = vadd.f32 0.0, %v505
  %507 = vmatmul.f32.gmra.mxu0 %v193
  %v508 = vpop.f32.mrf.mxu0
  %v509 = vadd.f32 0.0, %v508
  %510 = vmatmul.f32.gmra.mxu0 %v196
  %v511 = vpop.f32.mrf.mxu0
  %v512 = vadd.f32 0.0, %v511
  %513 = vmatmul.f32.gmra.mxu0 %v199
  %v514 = vpop.f32.mrf.mxu0
  %v515 = vadd.f32 0.0, %v514
  %516 = vdwg.mxu0
  %v517 = vadd.f32 %v462, %v494
  %v518 = vadd.f32 %v463, %v497
  %v519 = vadd.f32 %v464, %v500
  %v520 = vadd.f32 %v465, %v503
  %v521 = vadd.f32 %v466, %v506
  %v522 = vadd.f32 %v467, %v509
  %v523 = vadd.f32 %v468, %v512
  %v524 = vadd.f32 %v469, %v515
  %v526 = vsel %vm120, %v414, 0
  %528 = vmatpush.msra.mxu0 0.0
  %529 = vmatpush.msra.mxu0 0.0
  %530 = vmatpush.msra.mxu0 0.0
  %531 = vmatpush.msra.mxu0 0.0
  %532 = vmatpush.msra.mxu0 0.0
  %533 = vmatpush.msra.mxu0 0.0
  %534 = vmatpush.msra.mxu0 0.0
  %535 = vmatpush.msra.mxu0 0.0
  %536 = vmatpush.msra.mxu0 0.0
  %537 = vmatpush.msra.mxu0 0.0
  %538 = vmatpush.msra.mxu0 0.0
  %539 = vmatpush.msra.mxu0 0.0
  %540 = vmatpush.msra.mxu0 0.0
  %541 = vmatpush.msra.mxu0 0.0
  %542 = vmatpush.msra.mxu0 0.0
  %543 = vmatpush.msra.mxu0 %v526
  %544 = vmatmul.f32.gmra.mxu0 %v254
  %v545 = vpop.f32.mrf.mxu0
  %v546 = vadd.f32 0.0, %v545
  %547 = vmatmul.f32.gmra.mxu0 %v257
  %v548 = vpop.f32.mrf.mxu0
  %v549 = vadd.f32 0.0, %v548
  %550 = vmatmul.f32.gmra.mxu0 %v260
  %v551 = vpop.f32.mrf.mxu0
  %v552 = vadd.f32 0.0, %v551
  %553 = vmatmul.f32.gmra.mxu0 %v263
  %v554 = vpop.f32.mrf.mxu0
  %v555 = vadd.f32 0.0, %v554
  %556 = vmatmul.f32.gmra.mxu0 %v266
  %v557 = vpop.f32.mrf.mxu0
  %v558 = vadd.f32 0.0, %v557
  %559 = vmatmul.f32.gmra.mxu0 %v269
  %v560 = vpop.f32.mrf.mxu0
  %v561 = vadd.f32 0.0, %v560
  %562 = vmatmul.f32.gmra.mxu0 %v272
  %v563 = vpop.f32.mrf.mxu0
  %v564 = vadd.f32 0.0, %v563
  %565 = vmatmul.f32.gmra.mxu0 %v275
  %v566 = vpop.f32.mrf.mxu0
  %v567 = vadd.f32 0.0, %v566
  %568 = vdwg.mxu0
  %v569 = vadd.f32 %v517, %v546
  %v570 = vadd.f32 %v518, %v549
  %v571 = vadd.f32 %v519, %v552
  %v572 = vadd.f32 %v520, %v555
  %v573 = vadd.f32 %v521, %v558
  %v574 = vadd.f32 %v522, %v561
  %v575 = vadd.f32 %v523, %v564
  %v576 = vadd.f32 %v524, %v567
  %v577 = vxor.u32 %v573, 2147483648
  %v578 = vxor.u32 %v574, 2147483648
  %v579 = vxor.u32 %v575, 2147483648
  %v580 = vxor.u32 %v576, 2147483648
  %v581 = vmul.f32 %v577, 1.442695
  %v582 = vpow.pop %v581
  %v583 = vmul.f32 %v578, 1.442695
  %v584 = vpow.pop %v583
  %v585 = vmul.f32 %v579, 1.442695
  %v586 = vpow.pop %v585
  %v587 = vmul.f32 %v580, 1.442695
  %v588 = vpow.pop %v587
  %v589 = vadd.f32 %v582, 1.0
  %v590 = vadd.f32 %v584, 1.0
  %v591 = vadd.f32 %v586, 1.0
  %v592 = vadd.f32 %v588, 1.0
  %v593 = vrcp.pop %v589
  %v594 = vmul.f32 %v589, %v593
  %v595 = vsub.f32 1.0, %v594
  %v596 = vmul.f32 %v593, %v595
  %v597 = vadd.f32 %v593, %v596
  %vm598 = vweird.f32 %v589
  %vm599 = vweird.f32 %v593
  %vm600 = vmor %vm598, %vm599
  %v601 = vsel %vm600, %v593, %v597
  %v602 = vand.u32 2147483647, %v589
  %vm603 = vcmp.eq.f32.partialorder %v602, 8.507059e+37
  %v604 = vand.u32 %v589, 2147483648
  %v605 = vor.u32 1.1754944e-38, %v604
  %v606 = vsel %vm603, %v605, %v601
  %v607 = vmul.f32 1.0, %v606
  %v608 = vrcp.pop %v590
  %v609 = vmul.f32 %v590, %v608
  %v610 = vsub.f32 1.0, %v609
  %v611 = vmul.f32 %v608, %v610
  %v612 = vadd.f32 %v608, %v611
  %vm613 = vweird.f32 %v590
  %vm614 = vweird.f32 %v608
  %vm615 = vmor %vm613, %vm614
  %v616 = vsel %vm615, %v608, %v612
  %v617 = vand.u32 2147483647, %v590
  %vm618 = vcmp.eq.f32.partialorder %v617, 8.507059e+37
  %v619 = vand.u32 %v590, 2147483648
  %v620 = vor.u32 1.1754944e-38, %v619
  %v621 = vsel %vm618, %v620, %v616
  %v622 = vmul.f32 1.0, %v621
  %v623 = vrcp.pop %v591
  %v624 = vmul.f32 %v591, %v623
  %v625 = vsub.f32 1.0, %v624
  %v626 = vmul.f32 %v623, %v625
  %v627 = vadd.f32 %v623, %v626
  %vm628 = vweird.f32 %v591
  %vm629 = vweird.f32 %v623
  %vm630 = vmor %vm628, %vm629
  %v631 = vsel %vm630, %v623, %v627
  %v632 = vand.u32 2147483647, %v591
  %vm633 = vcmp.eq.f32.partialorder %v632, 8.507059e+37
  %v634 = vand.u32 %v591, 2147483648
  %v635 = vor.u32 1.1754944e-38, %v634
  %v636 = vsel %vm633, %v635, %v631
  %v637 = vmul.f32 1.0, %v636
  %v638 = vrcp.pop %v592
  %v639 = vmul.f32 %v592, %v638
  %v640 = vsub.f32 1.0, %v639
  %v641 = vmul.f32 %v638, %v640
  %v642 = vadd.f32 %v638, %v641
  %vm643 = vweird.f32 %v592
  %vm644 = vweird.f32 %v638
  %vm645 = vmor %vm643, %vm644
  %v646 = vsel %vm645, %v638, %v642
  %v647 = vand.u32 2147483647, %v592
  %vm648 = vcmp.eq.f32.partialorder %v647, 8.507059e+37
  %v649 = vand.u32 %v592, 2147483648
  %v650 = vor.u32 1.1754944e-38, %v649
  %v651 = vsel %vm648, %v650, %v646
  %v652 = vmul.f32 1.0, %v651
  %v653 = vmul.f32 %v569, %v607
  %v654 = vmul.f32 %v570, %v622
  %v655 = vmul.f32 %v571, %v637
  %v656 = vmul.f32 %v572, %v652
  %s657 = scalar_lea.vmem %s3, 32
  %658 = vst [vmem:[%s657] sm:$0xff] %v653
  %659 = vst [vmem:[%s657 + $0x8] sm:$0xff] %v654
  %660 = vst [vmem:[%s657 + $0x10] sm:$0xff] %v655
  %661 = vst [vmem:[%s657 + $0x18] sm:$0xff] %v656
  // Predicated region
  $region14: #{temporal_conv_layer_forward.1} parent=0 // pred_check
    _
  $region15: #{temporal_conv_layer_forward.1} parent=0 // pred_check_branch
    %663 = sbr.rel (0) target = $region17
  $region16: #{temporal_conv_layer_forward.1} parent=0 // pred_region
    _
  $region17: #{temporal_conv_layer_forward.1} parent=0 // pred_fallthru
    _
  // Predicated region
  $region18: #{temporal_conv_layer_forward.1} parent=0 // pred_check
    _
  $region19: #{temporal_conv_layer_forward.1} parent=0 // pred_check_branch
    %665 = sbr.rel (0) target = $region21
  $region20: #{temporal_conv_layer_forward.1} parent=0 // pred_region
    _
  $region21: #{temporal_conv_layer_forward.1} parent=0 // pred_fallthru
    _

</llo_original>
